<compile_context>
chip_gen: v7x
topology: tpu7x:2x2x1
jax: 0.10.0
libtpu: 0.0.40
codegen_flags: <defaults>
</compile_context>

<pallas_src>
import functools

import jax
import jax.numpy as jnp
from jax.experimental import pallas as pl
from jax.experimental.pallas import tpu as pltpu


# ~48 MiB keeps the scoped-VMEM request safe on v7x (64 MiB physical per TC);
# v5e/v6e (128 MiB) have strictly more headroom.
_VMEM_CAP = 48 << 20


def _vmem_limit(bytes_needed):
    return int(min(_VMEM_CAP, max(32 << 20, bytes_needed)))


# --------------------------------------------------------------------------
# Fused single-pass kernel: mean + gate MLP + gating multiply per batch item.
# --------------------------------------------------------------------------
def _fused_kernel(x_ref, w1t_ref, b1_ref, w2_ref, b2_ref, o_ref, *, inv_hw):
    # x_ref:   (1, C, HW)  input slab (x dtype)
    # w1t_ref: (C, C_mid)  squeeze weight, pre-transposed (f32)
    # b1_ref:  (1, C_mid)  squeeze bias (f32)
    # w2_ref:  (C, C_mid)  expand weight (f32)
    # b2_ref:  (C, 1)      expand bias (f32)
    x = x_ref[0]                                                   # (C, HW)

    # Spatial mean per channel; f32 accumulate fused into the lane reduce
    # (no f32 copy of the whole slab is materialized).
    m = jnp.sum(x, axis=1, keepdims=True, dtype=jnp.float32) * inv_hw    # (C, 1)

    # Squeeze: z_j = relu6(b1_j + sum_c w1[j, c] * m_c)  — VPU + sublane reduce.
    z = jnp.sum(w1t_ref[...] * m, axis=0, keepdims=True) + b1_ref[...]   # (1, C_mid)
    z = jnp.clip(z, 0.0, 6.0)

    # Expand: e_c = sigmoid(b2_c + sum_j w2[c, j] * z_j)  — VPU + lane reduce.
    e = jnp.sum(w2_ref[...] * z, axis=1, keepdims=True) + b2_ref[...]    # (C, 1)
    e = jax.nn.sigmoid(e)

    # Gating multiply stays in x's dtype (bf16 stays bf16 -> minimum HBM write).
    o_ref[0] = x * e.astype(x.dtype)


def _cse_fused(x_flat, w1, b1, w2, b2):
    N, C, HW = x_flat.shape
    C_mid = w1.shape[0]

    w1t = jnp.asarray(w1, jnp.float32).T                # (C, C_mid)
    b1r = jnp.asarray(b1, jnp.float32).reshape(1, C_mid)
    w2f = jnp.asarray(w2, jnp.float32)                  # (C, C_mid)
    b2c = jnp.asarray(b2, jnp.float32).reshape(C, 1)

    slab_bytes = C * HW * x_flat.dtype.itemsize
    vmem = _vmem_limit(4 * slab_bytes + (2 << 20))      # 2x in + 2x out + slack

    return pl.pallas_call(
        functools.partial(_fused_kernel, inv_hw=1.0 / HW),
        out_shape=jax.ShapeDtypeStruct((N, C, HW), x_flat.dtype),
        grid_spec=pltpu.PrefetchScalarGridSpec(
            num_scalar_prefetch=0,
            grid=(N,),
            in_specs=[
                pl.BlockSpec((1, C, HW), lambda n: (n, 0, 0)),
                pl.BlockSpec((C, C_mid), lambda n: (0, 0)),   # resident weights
                pl.BlockSpec((1, C_mid), lambda n: (0, 0)),
                pl.BlockSpec((C, C_mid), lambda n: (0, 0)),
                pl.BlockSpec((C, 1), lambda n: (0, 0)),
            ],
            out_specs=pl.BlockSpec((1, C, HW), lambda n: (n, 0, 0)),
        ),
        compiler_params=pltpu.CompilerParams(
            dimension_semantics=("parallel",),
            vmem_limit_bytes=vmem),
    )(x_flat, w1t, b1r, w2f, b2c)


# --------------------------------------------------------------------------
# Streaming fallback (slab does not fit VMEM): 2 passes + XLA gate MLP.
# --------------------------------------------------------------------------
def _pick_hw_tile(hw, c, itemsize, budget_bytes=4 << 20):
    """Largest lane-dense (multiple-of-128) HW tile within ~budget_bytes per
    (C, t_hw) block; prefers exact divisors of HW, otherwise returns the cap
    (callers mask the ragged tail) — never the unbounded full extent."""
    cap = max(128, (budget_bytes // (itemsize * c)) // 128 * 128)
    if hw <= cap:
        return hw                       # full extent: always legal, one tile
    for t in range(cap, 127, -128):     # lane-dense divisors, largest first
        if hw % t == 0:
            return t
    return cap                          # non-divisor tile; tail is masked


def _mean_kernel(x_ref, psum_ref, *, hw, t_hw, n_t, need_mask):
    # x_ref: (1, C, t_hw); psum_ref: (1, 1, C, 1) f32 partial-sum accumulator,
    # resident across the "arbitrary" HW-tile axis.
    s = pl.program_id(1)
    t = pl.program_id(2)

    @pl.when(t == 0)
    def _init():
        psum_ref[...] = jnp.zeros_like(psum_ref)

    x = x_ref[0]                                               # (C, t_hw)
    if need_mask:                                              # ragged tail lanes -> 0
        base = (s * n_t + t) * t_hw
        lane = jax.lax.broadcasted_iota(jnp.int32, x.shape, 1) + base
        x = jnp.where(lane < hw, x, jnp.zeros((), x.dtype))
    # f32 accumulate fused into the XLU lane reduce (no f32 tile temporary).
    psum_ref[0, 0] += jnp.sum(x, axis=1, keepdims=True, dtype=jnp.float32)


def _gate_kernel(x_ref, e_ref, o_ref):
    # Pure VPU: one multiply per element, e broadcast along lanes; x dtype kept.
    o_ref[0] = x_ref[0] * e_ref[0]


def _cse_streaming(x_flat, w1, b1, w2, b2):
    N, C, HW = x_flat.shape
    itemsize = x_flat.dtype.itemsize

    t_hw = _pick_hw_tile(HW, C, itemsize)
    total_t = pl.cdiv(HW, t_hw)
    need_mask = (HW % t_hw) != 0
    # 2-way split of the HW-tile axis so both v7x TensorCores get work even at
    # N == 1 (harmless on single-TC v5e/v6e).  Only when it splits evenly.
    n_s = 2 if (not need_mask and total_t % 2 == 0) else 1
    n_t = total_t // n_s

    tile_bytes = C * t_hw * itemsize
    vmem = _vmem_limit(4 * tile_bytes + (4 << 20))

    # ---- pass 1: partial spatial sums per (N, split, C) ----
    psum = pl.pallas_call(
        functools.partial(_mean_kernel, hw=HW, t_hw=t_hw, n_t=n_t,
                          need_mask=need_mask),
        out_shape=jax.ShapeDtypeStruct((N, n_s, C, 1), jnp.float32),
        grid_spec=pltpu.PrefetchScalarGridSpec(
            num_scalar_prefetch=0,
            grid=(N, n_s, n_t),
            in_specs=[pl.BlockSpec((1, C, t_hw),
                                   lambda n, s, t: (n, 0, s * n_t + t))],
            out_specs=pl.BlockSpec((1, 1, C, 1),
                                   lambda n, s, t: (n, s, 0, 0)),
        ),
        compiler_params=pltpu.CompilerParams(
            dimension_semantics=("parallel", "parallel", "arbitrary"),
            vmem_limit_bytes=vmem),
    )(x_flat)

    # ---- channel-gate MLP (tiny; finish the reduction + scale here too) ----
    mean = jnp.sum(psum, axis=1)[..., 0] * (1.0 / HW)               # (N, C) f32
    z = jnp.clip(mean @ jnp.asarray(w1, jnp.float32).T
                 + jnp.asarray(b1, jnp.float32)[None, :], 0.0, 6.0)  # ReLU6
    e = jax.nn.sigmoid(z @ jnp.asarray(w2, jnp.float32).T
                       + jnp.asarray(b2, jnp.float32)[None, :])      # (N, C)
    e = e.astype(x_flat.dtype).reshape(N, C, 1)

    # ---- pass 2: streaming gating out = x * e ----
    out = pl.pallas_call(
        _gate_kernel,
        out_shape=jax.ShapeDtypeStruct((N, C, HW), x_flat.dtype),
        grid_spec=pltpu.PrefetchScalarGridSpec(
            num_scalar_prefetch=0,
            grid=(N, total_t),
            in_specs=[
                pl.BlockSpec((1, C, t_hw), lambda n, t: (n, 0, t)),
                pl.BlockSpec((1, C, 1), lambda n, t: (n, 0, 0)),
            ],
            out_specs=pl.BlockSpec((1, C, t_hw), lambda n, t: (n, 0, t)),
        ),
        compiler_params=pltpu.CompilerParams(
            dimension_semantics=("parallel", "parallel"),
            vmem_limit_bytes=vmem),
    )(x_flat, e)
    return out


# --------------------------------------------------------------------------
# Public wrapper
# --------------------------------------------------------------------------
def cse_pallas(x, w1, b1, w2, b2):
    """cSE forward.  x: (N, C, H, W); w1: (C_mid, C); b1: (C_mid,);
    w2: (C, C_mid); b2: (C,).  Returns (N, C, H, W)."""
    N, C, H, W = x.shape
    HW = H * W
    x_flat = x.reshape(N, C, HW)

    slab_bytes = C * HW * x.dtype.itemsize
    # Fused path needs ~4x slab (double-buffered in + out) + weights/slack.
    if 4 * slab_bytes + (2 << 20) <= _VMEM_CAP:
        out = _cse_fused(x_flat, w1, b1, w2, b2)
    else:
        out = _cse_streaming(x_flat, w1, b1, w2, b2)
    return out.reshape(N, C, H, W)


def cse_reference(x, w1, b1, w2, b2):
    """Pure-JAX reference matching the PyTorch cSE.forward exactly."""
    mean = jnp.mean(x, axis=(2, 3))                             # AdaptiveAvgPool2d(1)
    z = jnp.clip(mean @ w1.T + b1[None, :], 0.0, 6.0)           # 1x1 conv + ReLU6
    e = jax.nn.sigmoid(z @ w2.T + b2[None, :])                  # 1x1 conv + Sigmoid
    return x * e[:, :, None, None]                              # x * xx


if __name__ == "__main__":
    # cSE(planes=8, r=0.25) -> mid channels = int(8 * 0.25) = 2
    N, C, H, W = 2, 8, 16, 16
    r = 0.25
    C_mid = int(C * r)

    key = jax.random.PRNGKey(0)
    kx, k1, k2, k3, k4 = jax.random.split(key, 5)

    x = jax.random.normal(kx, (N, C, H, W), dtype=jnp.float32)

    # Deterministic Conv2d-1x1-style fan-in uniform init.
    bnd1 = 1.0 / (C ** 0.5)
    w1 = jax.random.uniform(k1, (C_mid, C), jnp.float32, -bnd1, bnd1)   # squeeze weight
    b1 = jax.random.uniform(k2, (C_mid,), jnp.float32, -bnd1, bnd1)     # squeeze bias
    bnd2 = 1.0 / (C_mid ** 0.5)
    w2 = jax.random.uniform(k3, (C, C_mid), jnp.float32, -bnd2, bnd2)   # expand weight
    b2 = jax.random.uniform(k4, (C,), jnp.float32, -bnd2, bnd2)         # expand bias

    out = cse_pallas(x, w1, b1, w2, b2)
    jax.block_until_ready(out)

    ref = cse_reference(x, w1, b1, w2, b2)
    assert out.shape == (N, C, H, W)
    assert jnp.allclose(out, ref, atol=1e-5, rtol=1e-5), "mismatch vs reference"

    print("KERNEL_OK")
</pallas_src>

<mosaic_0001>
module attributes {stable_mosaic.version = 11 : i64} {
  func.func @_fused_kernel(%arg0: i32, %arg1: memref<1x8x256xf32, #tpu.memory_space<vmem>>, %arg2: memref<8x2xf32, #tpu.memory_space<vmem>>, %arg3: memref<1x2xf32, #tpu.memory_space<vmem>>, %arg4: memref<8x2xf32, #tpu.memory_space<vmem>>, %arg5: memref<8x1xf32, #tpu.memory_space<vmem>>, %arg6: memref<1x8x256xf32, #tpu.memory_space<vmem>>) attributes {dimension_semantics = [#tpu.dimension_semantics<parallel>], iteration_bounds = array<i64: 2>, scalar_prefetch = 0 : i64, scratch_operands = 0 : i64, tpu.core_type = #tpu.core_type<tc>, window_params = [{transform_indices = @transform_0, window_bounds = array<i64: 1, 8, 256>}, {pipeline_mode = #tpu.pipeline_mode<synchronous>, transform_indices = @transform_1, window_bounds = array<i64: 8, 2>}, {pipeline_mode = #tpu.pipeline_mode<synchronous>, transform_indices = @transform_2, window_bounds = array<i64: 1, 2>}, {pipeline_mode = #tpu.pipeline_mode<synchronous>, transform_indices = @transform_3, window_bounds = array<i64: 8, 2>}, {pipeline_mode = #tpu.pipeline_mode<synchronous>, transform_indices = @transform_4, window_bounds = array<i64: 8, 1>}, {transform_indices = @transform_5, window_bounds = array<i64: 1, 8, 256>}]} {
    %c0 = arith.constant 0 : index
    %c0_0 = arith.constant 0 : index
    %c0_1 = arith.constant 0 : index
    %0 = vector.load %arg1[%c0, %c0_0, %c0_1] : memref<1x8x256xf32, #tpu.memory_space<vmem>>, vector<1x8x256xf32>
    %1 = vector.shape_cast %0 : vector<1x8x256xf32> to vector<8x256xf32>
    %cst = arith.constant dense<0.000000e+00> : vector<8xf32>
    %2 = vector.multi_reduction <add>, %1, %cst [1] : vector<8x256xf32> to vector<8xf32>
    %3 = vector.shape_cast %2 : vector<8xf32> to vector<8x1xf32>
    %cst_2 = arith.constant 3.906250e-03 : f32
    %4 = vector.broadcast %cst_2 : f32 to vector<8x1xf32>
    %5 = arith.mulf %3, %4 : vector<8x1xf32>
    %c0_3 = arith.constant 0 : index
    %c0_4 = arith.constant 0 : index
    %6 = vector.load %arg2[%c0_3, %c0_4] : memref<8x2xf32, #tpu.memory_space<vmem>>, vector<8x2xf32>
    %7 = vector.broadcast %5 : vector<8x1xf32> to vector<8x2xf32>
    %8 = arith.mulf %6, %7 : vector<8x2xf32>
    %cst_5 = arith.constant dense<0.000000e+00> : vector<2xf32>
    %9 = vector.multi_reduction <add>, %8, %cst_5 [0] : vector<8x2xf32> to vector<2xf32>
    %10 = vector.shape_cast %9 : vector<2xf32> to vector<1x2xf32>
    %c0_6 = arith.constant 0 : index
    %c0_7 = arith.constant 0 : index
    %11 = vector.load %arg3[%c0_6, %c0_7] : memref<1x2xf32, #tpu.memory_space<vmem>>, vector<1x2xf32>
    %12 = arith.addf %10, %11 : vector<1x2xf32>
    %cst_8 = arith.constant 0.000000e+00 : f32
    %cst_9 = arith.constant 6.000000e+00 : f32
    %13 = vector.broadcast %cst_8 : f32 to vector<1x2xf32>
    %14 = arith.maximumf %13, %12 : vector<1x2xf32>
    %15 = vector.broadcast %cst_9 : f32 to vector<1x2xf32>
    %16 = arith.minimumf %15, %14 : vector<1x2xf32>
    %c0_10 = arith.constant 0 : index
    %c0_11 = arith.constant 0 : index
    %17 = vector.load %arg4[%c0_10, %c0_11] : memref<8x2xf32, #tpu.memory_space<vmem>>, vector<8x2xf32>
    %18 = vector.broadcast %16 : vector<1x2xf32> to vector<8x2xf32>
    %19 = arith.mulf %17, %18 : vector<8x2xf32>
    %cst_12 = arith.constant dense<0.000000e+00> : vector<8xf32>
    %20 = vector.multi_reduction <add>, %19, %cst_12 [1] : vector<8x2xf32> to vector<8xf32>
    %21 = vector.shape_cast %20 : vector<8xf32> to vector<8x1xf32>
    %c0_13 = arith.constant 0 : index
    %c0_14 = arith.constant 0 : index
    %22 = vector.load %arg5[%c0_13, %c0_14] : memref<8x1xf32, #tpu.memory_space<vmem>>, vector<8x1xf32>
    %23 = arith.addf %21, %22 : vector<8x1xf32>
    %24 = arith.negf %23 : vector<8x1xf32>
    %25 = math.exp %24 : vector<8x1xf32>
    %cst_15 = arith.constant 1.000000e+00 : f32
    %26 = vector.broadcast %cst_15 : f32 to vector<8x1xf32>
    %27 = arith.addf %26, %25 : vector<8x1xf32>
    %28 = arith.divf %26, %27 : vector<8x1xf32>
    %29 = vector.broadcast %28 : vector<8x1xf32> to vector<8x256xf32>
    %30 = arith.mulf %1, %29 : vector<8x256xf32>
    %c0_16 = arith.constant 0 : index
    %c0_17 = arith.constant 0 : index
    %c0_18 = arith.constant 0 : index
    %31 = vector.load %arg6[%c0_16, %c0_17, %c0_18] : memref<1x8x256xf32, #tpu.memory_space<vmem>>, vector<1x8x256xf32>
    %32 = vector.shape_cast %31 : vector<1x8x256xf32> to vector<8x256xf32>
    %33 = vector.shape_cast %30 : vector<8x256xf32> to vector<1x8x256xf32>
    tpu.vector_store %arg6[%c0_16, %c0_17, %c0_18], %33 {strides = array<i32>} : memref<1x8x256xf32, #tpu.memory_space<vmem>>, vector<1x8x256xf32>,
    return
  }
  func.func @transform_0(%arg0: i32) -> (i32, i32, i32) {
    %c0_i32 = arith.constant 0 : i32
    %c0_i32_0 = arith.constant 0 : i32
    %c0_i32_1 = arith.constant 0 : i32
    return %arg0, %c0_i32, %c0_i32_0 : i32, i32, i32
  }
  func.func @transform_1(%arg0: i32) -> (i32, i32) {
    %c0_i32 = arith.constant 0 : i32
    %c0_i32_0 = arith.constant 0 : i32
    %c0_i32_1 = arith.constant 0 : i32
    return %c0_i32, %c0_i32_0 : i32, i32
  }
  func.func @transform_2(%arg0: i32) -> (i32, i32) {
    %c0_i32 = arith.constant 0 : i32
    %c0_i32_0 = arith.constant 0 : i32
    %c0_i32_1 = arith.constant 0 : i32
    return %c0_i32, %c0_i32_0 : i32, i32
  }
  func.func @transform_3(%arg0: i32) -> (i32, i32) {
    %c0_i32 = arith.constant 0 : i32
    %c0_i32_0 = arith.constant 0 : i32
    %c0_i32_1 = arith.constant 0 : i32
    return %c0_i32, %c0_i32_0 : i32, i32
  }
  func.func @transform_4(%arg0: i32) -> (i32, i32) {
    %c0_i32 = arith.constant 0 : i32
    %c0_i32_0 = arith.constant 0 : i32
    %c0_i32_1 = arith.constant 0 : i32
    return %c0_i32, %c0_i32_0 : i32, i32
  }
  func.func @transform_5(%arg0: i32) -> (i32, i32, i32) {
    %c0_i32 = arith.constant 0 : i32
    %c0_i32_0 = arith.constant 0 : i32
    %c0_i32_1 = arith.constant 0 : i32
    return %arg0, %c0_i32, %c0_i32_0 : i32, i32, i32
  }
}

</mosaic_0001>

<llo_original>
// kernel: tpu_custom_call.1
$region0: #{tpu_custom_call.1}
  #allocation0 [shape = 'u32[]', space=smem, size = 0x4, offset = 0x4, fixed_abs, tag = 'smem constant byte address 0x4 - core index']
  #allocation1 [shape = 'u32[144,128]{1,0:T(1,128)}', space=vmem, size = 0x12000, scoped, tag = 'internal scratch']
  %s0 = inlined_call_operand.hbm [shape: f32[2,8,256], index: 0, kind: input, shape index: {}]
  %s1 = inlined_call_operand.vmem [shape: f32[8,2], index: 1, kind: input, shape index: {}]
  %s2 = inlined_call_operand.vmem [shape: f32[1,2], index: 2, kind: input, shape index: {}]
  %s3 = inlined_call_operand.vmem [shape: f32[8,2], index: 3, kind: input, shape index: {}]
  %s4 = inlined_call_operand.vmem [shape: f32[8,1], index: 4, kind: input, shape index: {}]
  %s5 = inlined_call_operand.hbm [shape: f32[2,8,256], index: 5, kind: output, shape index: {}]
  %s6 = sld [smem:[#allocation0]]
  $region57: #{tpu_custom_call.1} parent=0
    _
  %s8 = ssub.s32 1, %s6
  %s9 = scalar_select 0, %s8, %s6
  $region1: #{tpu_custom_call.1} parent=0
    #allocation2 [shape = 'u8[16384]{0}', space=vmem, size = 0x4000, scoped, tag = 'input window, operand 0']
    #allocation3 [shape = 's32[2]{0}', space=sflag, size = 0x8, scoped, tag = 'scoped memory for tpu_custom_call.1']
    #allocation4 [shape = 's32[2]{0}', space=sflag, size = 0x8, scoped, tag = 'scoped memory for tpu_custom_call.1']
    #allocation5 [shape = 'u8[16384]{0}', space=vmem, size = 0x4000, scoped, tag = 'output window, operand 0']
    %10 = vsyncpa [#allocation3], 0
    %s11 = scalar_lea.sflag [#allocation3], 1
    %12 = vsyncpa %s11, 0
    %13 = vsyncpa [#allocation4], 0
    %s14 = scalar_lea.sflag [#allocation4], 1
    %15 = vsyncpa %s14, 0
    loop: start=0, step=1, limit=4
    $region2: #{tpu_custom_call.1} parent=1 // loop_pre_header
      _
    $region3: #{tpu_custom_call.1} parent=1 // loop_header
      %s17 = sphi 0, %s21
      %p18 = scmp.ge.s32.totalorder %s17, 4
      %s27 = sphi 0, %s29
      %s30 = sphi 0, %s27
      %s31 = sphi 0, %s30
      %s47 = sphi 0, %s31
      %s51 = sphi 0, %s51
      %s53 = sphi 0, %s51
      %s54 = sphi 0, %s53
      %s68 = sphi 0, %s54
      %s72 = sphi 0, %s72
      %s74 = sphi 0, %s72
      %s75 = sphi 0, %s74
      %s89 = sphi 0, %s75
      %s93 = sphi 0, %s93
      %s95 = sphi 0, %s93
      %s96 = sphi 0, %s95
      %s110 = sphi 0, %s96
      %s114 = sphi 0, %s114
      %s116 = sphi 0, %s114
      %s117 = sphi 0, %s116
      %s131 = sphi 0, %s117
      %s137 = sphi 0, %s139
      %s140 = sphi 0, %s137
      %s141 = sphi 0, %s140
      %s157 = sphi 0, %s141
    $region4: #{tpu_custom_call.1} parent=1 // loop_header_branch
      %20 = sbr.rel (%p18) target = $region8
    $region5: #{tpu_custom_call.1} parent=1 // loop_body
      %s22 = ssub.s32 %s17, 1
      %s23 = ssub.s32 %s17, 2
      %s24 = sadd.s32 %s17, 1
      %s25 = ssub.s32 %s17, %s24
      %p26 = scmp.eq.s32.totalorder %s25, 0
      %s28 = sadd.s32 %s27, 1
      %s29 = scalar_select %p26, %s27, %s28
      %p32 = pneg %p26
      %p33 = scmp.eq.s32.totalorder %s17, 1
      %p34 = por %p32, %p33
      %p35 = scmp.ne.s32.totalorder %s27, %s30
      %p36 = scmp.eq.s32.totalorder %s17, 0
      %p37 = por %p35, %p36
      %p38 = scmp.ne.s32.totalorder %s27, %s30
      %p39 = scmp.eq.s32.totalorder %s22, 1
      %p40 = por %p38, %p39
      %p41 = scmp.ne.s32.totalorder %s30, %s31
      %p42 = scmp.eq.s32.totalorder %s22, 0
      %p43 = por %p41, %p42
      %p44 = scmp.ne.s32.totalorder %s30, %s31
      %p45 = scmp.eq.s32.totalorder %s23, 1
      %p46 = por %p44, %p45
      %p48 = scmp.ne.s32.totalorder %s31, %s47
      %p49 = scmp.eq.s32.totalorder %s23, 0
      %p50 = por %p48, %p49
      %s52 = sadd.s32 %s51, 1
      %p55 = scmp.eq.s32.totalorder %s17, 1
      %p56 = scmp.ne.s32.totalorder %s51, %s53
      %p57 = scmp.eq.s32.totalorder %s17, 0
      %p58 = por %p56, %p57
      %p59 = scmp.ne.s32.totalorder %s51, %s53
      %p60 = scmp.eq.s32.totalorder %s22, 1
      %p61 = por %p59, %p60
      %p62 = scmp.ne.s32.totalorder %s53, %s54
      %p63 = scmp.eq.s32.totalorder %s22, 0
      %p64 = por %p62, %p63
      %p65 = scmp.ne.s32.totalorder %s53, %s54
      %p66 = scmp.eq.s32.totalorder %s23, 1
      %p67 = por %p65, %p66
      %p69 = scmp.ne.s32.totalorder %s54, %s68
      %p70 = scmp.eq.s32.totalorder %s23, 0
      %p71 = por %p69, %p70
      %s73 = sadd.s32 %s72, 1
      %p76 = scmp.eq.s32.totalorder %s17, 1
      %p77 = scmp.ne.s32.totalorder %s72, %s74
      %p78 = scmp.eq.s32.totalorder %s17, 0
      %p79 = por %p77, %p78
      %p80 = scmp.ne.s32.totalorder %s72, %s74
      %p81 = scmp.eq.s32.totalorder %s22, 1
      %p82 = por %p80, %p81
      %p83 = scmp.ne.s32.totalorder %s74, %s75
      %p84 = scmp.eq.s32.totalorder %s22, 0
      %p85 = por %p83, %p84
      %p86 = scmp.ne.s32.totalorder %s74, %s75
      %p87 = scmp.eq.s32.totalorder %s23, 1
      %p88 = por %p86, %p87
      %p90 = scmp.ne.s32.totalorder %s75, %s89
      %p91 = scmp.eq.s32.totalorder %s23, 0
      %p92 = por %p90, %p91
      %s94 = sadd.s32 %s93, 1
      %p97 = scmp.eq.s32.totalorder %s17, 1
      %p98 = scmp.ne.s32.totalorder %s93, %s95
      %p99 = scmp.eq.s32.totalorder %s17, 0
      %p100 = por %p98, %p99
      %p101 = scmp.ne.s32.totalorder %s93, %s95
      %p102 = scmp.eq.s32.totalorder %s22, 1
      %p103 = por %p101, %p102
      %p104 = scmp.ne.s32.totalorder %s95, %s96
      %p105 = scmp.eq.s32.totalorder %s22, 0
      %p106 = por %p104, %p105
      %p107 = scmp.ne.s32.totalorder %s95, %s96
      %p108 = scmp.eq.s32.totalorder %s23, 1
      %p109 = por %p107, %p108
      %p111 = scmp.ne.s32.totalorder %s96, %s110
      %p112 = scmp.eq.s32.totalorder %s23, 0
      %p113 = por %p111, %p112
      %s115 = sadd.s32 %s114, 1
      %p118 = scmp.eq.s32.totalorder %s17, 1
      %p119 = scmp.ne.s32.totalorder %s114, %s116
      %p120 = scmp.eq.s32.totalorder %s17, 0
      %p121 = por %p119, %p120
      %p122 = scmp.ne.s32.totalorder %s114, %s116
      %p123 = scmp.eq.s32.totalorder %s22, 1
      %p124 = por %p122, %p123
      %p125 = scmp.ne.s32.totalorder %s116, %s117
      %p126 = scmp.eq.s32.totalorder %s22, 0
      %p127 = por %p125, %p126
      %p128 = scmp.ne.s32.totalorder %s116, %s117
      %p129 = scmp.eq.s32.totalorder %s23, 1
      %p130 = por %p128, %p129
      %p132 = scmp.ne.s32.totalorder %s117, %s131
      %p133 = scmp.eq.s32.totalorder %s23, 0
      %p134 = por %p132, %p133
      %s135 = ssub.s32 %s17, %s24
      %p136 = scmp.eq.s32.totalorder %s135, 0
      %s138 = sadd.s32 %s137, 1
      %s139 = scalar_select %p136, %s137, %s138
      %p142 = pneg %p136
      %p143 = scmp.eq.s32.totalorder %s17, 1
      %p144 = por %p142, %p143
      %p145 = scmp.ne.s32.totalorder %s137, %s140
      %p146 = scmp.eq.s32.totalorder %s17, 0
      %p147 = por %p145, %p146
      %p148 = scmp.ne.s32.totalorder %s137, %s140
      %p149 = scmp.eq.s32.totalorder %s22, 1
      %p150 = por %p148, %p149
      %p151 = scmp.ne.s32.totalorder %s140, %s141
      %p152 = scmp.eq.s32.totalorder %s22, 0
      %p153 = por %p151, %p152
      %p154 = scmp.ne.s32.totalorder %s140, %s141
      %p155 = scmp.eq.s32.totalorder %s23, 1
      %p156 = por %p154, %p155
      %p158 = scmp.ne.s32.totalorder %s141, %s157
      %p159 = scmp.eq.s32.totalorder %s23, 0
      %p160 = por %p158, %p159
      %p161 = scmp.le.s32.totalorder 1, %s17
      %p162 = scmp.lt.s32.totalorder %s17, 3
      %p163 = pnand %p161, %p162
      %p164 = pneg %p163
      // Predicated region
      $region9: #{tpu_custom_call.1} parent=5 // pred_check
        _
      $region10: #{tpu_custom_call.1} parent=5 // pred_check_branch
        %166 = sbr.rel (%p163) target = $region12
      $region11: #{tpu_custom_call.1} parent=5 // pred_region
        %s167 = ssub.s32 %s17, 1
        // Predicated region
        $region13: #{tpu_custom_call.1} parent=11 // pred_check
          %p168 = pneg %p64
        $region14: #{tpu_custom_call.1} parent=11 // pred_check_branch
          %170 = sbr.rel (%p168) target = $region16
        $region15: #{tpu_custom_call.1} parent=11 // pred_region
          _
        $region16: #{tpu_custom_call.1} parent=11 // pred_fallthru
          _
        // Predicated region
        $region17: #{tpu_custom_call.1} parent=11 // pred_check
          %p171 = pneg %p85
        $region18: #{tpu_custom_call.1} parent=11 // pred_check_branch
          %173 = sbr.rel (%p171) target = $region20
        $region19: #{tpu_custom_call.1} parent=11 // pred_region
          _
        $region20: #{tpu_custom_call.1} parent=11 // pred_fallthru
          _
        // Predicated region
        $region21: #{tpu_custom_call.1} parent=11 // pred_check
          %p174 = pneg %p106
        $region22: #{tpu_custom_call.1} parent=11 // pred_check_branch
          %176 = sbr.rel (%p174) target = $region24
        $region23: #{tpu_custom_call.1} parent=11 // pred_region
          _
        $region24: #{tpu_custom_call.1} parent=11 // pred_fallthru
          _
        // Predicated region
        $region25: #{tpu_custom_call.1} parent=11 // pred_check
          %p177 = pneg %p127
        $region26: #{tpu_custom_call.1} parent=11 // pred_check_branch
          %179 = sbr.rel (%p177) target = $region28
        $region27: #{tpu_custom_call.1} parent=11 // pred_region
          _
        $region28: #{tpu_custom_call.1} parent=11 // pred_fallthru
          _
      $region12: #{tpu_custom_call.1} parent=5 // pred_fallthru
        _
      %p180 = scmp.lt.s32.totalorder %s17, 2
      // Predicated region
      $region29: #{tpu_custom_call.1} parent=5 // pred_check
        %p181 = pneg %p180
      $region30: #{tpu_custom_call.1} parent=5 // pred_check_branch
        %183 = sbr.rel (%p181) target = $region32
      $region31: #{tpu_custom_call.1} parent=5 // pred_region
        // Predicated region
        $region33: #{tpu_custom_call.1} parent=31 // pred_check
          %p184 = pneg %p37
        $region34: #{tpu_custom_call.1} parent=31 // pred_check_branch
          %186 = sbr.rel (%p184) target = $region36
        $region35: #{tpu_custom_call.1} parent=31 // pred_region
          %s187 = sand.u32 %s27, 1
          %s188 = scalar_lea.sflag [#allocation3], %s187
          %s189 = sand.u32 %s27, 1
          %s190 = smul.addr %s189, 16
          %s191 = scalar_lea.vmem [#allocation2], %s190
          %s193 = ssub.s32 256, 256
          %194 = vsyncadd %s188, %s193
          %s195 = smul.addr %s17, 2
          %s196 = smul.addr %s195, 128
          %s197 = scalar_lea.hbm %s0, %s196
          %s199 = sshll.u32 %s191, 4
          %s200 = int_to_ptr.vmem [resolvable:$true] %s199
          %202 = dma.hbm_to_vmem [thread:$0]  %s197, 256, %s200, %s188
        $region36: #{tpu_custom_call.1} parent=31 // pred_fallthru
          _
      $region32: #{tpu_custom_call.1} parent=5 // pred_fallthru
        _
      %p203 = scmp.le.s32.totalorder 1, %s17
      %p204 = scmp.lt.s32.totalorder %s17, 3
      %p205 = pnand %p203, %p204
      %p206 = pneg %p205
      // Predicated region
      $region37: #{tpu_custom_call.1} parent=5 // pred_check
        _
      $region38: #{tpu_custom_call.1} parent=5 // pred_check_branch
        %208 = sbr.rel (%p205) target = $region40
      $region39: #{tpu_custom_call.1} parent=5 // pred_region
        %s209 = ssub.s32 %s17, 1
        %s210 = sand.u32 %s30, 1
        %s211 = scalar_lea.sflag [#allocation3], %s210
        %s212 = sand.u32 %s30, 1
        %s213 = smul.addr %s212, 16
        %s214 = scalar_lea.vmem [#allocation2], %s213
        // Predicated region
        $region41: #{tpu_custom_call.1} parent=39 // pred_check
          %p215 = pneg %p43
        $region42: #{tpu_custom_call.1} parent=39 // pred_check_branch
          %217 = sbr.rel (%p215) target = $region44
        $region43: #{tpu_custom_call.1} parent=39 // pred_region
          %218 = dma.done %s211, 256
        $region44: #{tpu_custom_call.1} parent=39 // pred_fallthru
          _
        %s219 = sand.u32 %s30, 1
        %s220 = scalar_lea.sflag [#allocation3], %s219
        %s221 = sand.u32 %s30, 1
        %s222 = smul.addr %s221, 16
        %s223 = scalar_lea.vmem [#allocation2], %s222
        %p224 = pneg %p43
        %p225 = pneg %p40
        %p226 = pneg %p64
        %p227 = pneg %p61
        %p228 = pneg %p85
        %p229 = pneg %p82
        %p230 = pneg %p106
        %p231 = pneg %p103
        %p232 = pneg %p127
        %p233 = pneg %p124
        %p234 = pneg %p153
        %p235 = pneg %p150
        %s236 = sand.u32 %s140, 1
        %s237 = scalar_lea.sflag [#allocation4], %s236
        %s238 = sand.u32 %s140, 1
        %s239 = smul.addr %s238, 16
        %s240 = scalar_lea.vmem [#allocation5], %s239
        %v241 = vld [vmem:[%s214] sm:$0xff]
        %v242 = vld [vmem:[%s214 + $0x8] sm:$0xff]
        %v243 = vadd.f32 %v241, %v242
        %244 = vadd.xlane.f32.xlu0 %v243
        %v245 = vpop.xlane.xlu0 %244
        %v246 = vmul.f32 %v245, 0.00390625
        %v247 = vld [vmem:[%s1] sm:$0xff]
        %v248 = vmul.f32 %v247, %v246
        %vm249 = vcmask 15360
        %v250 = vsel %vm249, %v248, 0.0
        %v251 = vrot.slane %v250, 4
        %v252 = vadd.f32 %v250, %v251
        %v253 = vrot.slane %v252, 2
        %v254 = vadd.f32 %v252, %v253
        %v255 = vrot.slane %v254, 1
        %v256 = vadd.f32 %v254, %v255
        %v257 = vld [vmem:[%s2] sm:$0x1]
        %v258 = vadd.f32 %v256, %v257
        %v259 = vmax.f32 %v258, 0.0
        %v260 = vmin.f32 %v259, 6.0
        %v261 = vld [vmem:[%s3] sm:$0xff]
        %v262 = vlaneseq
        %v263 = vshrl.u32 %v262, 7
        %v264 = vsub.s32 0, %v263
        %v265 = vrot.slane %v260, %v264
        %v266 = vmul.f32 %v261, %v265
        %v267 = vsel %vm249, %v266, 0.0
        %268 = vadd.xlane.f32.xlu0 %v267
        %v269 = vpop.xlane.xlu0 %268
        %v270 = vld [vmem:[%s4] sm:$0xff]
        %v271 = vadd.f32 %v269, %v270
        %v272 = vxor.u32 %v271, 2147483648
        %v273 = vmul.f32 %v272, 1.442695
        %v274 = vpow.pop %v273
        %v275 = vadd.f32 %v274, 1.0
        %v276 = vrcp.pop %v275
        %v277 = vmul.f32 1.0, %v276
        %279 = vset.pattern.permute.xlu0 0
        %280 = vperm.xlu0 %279, %v277
        %v281 = vpop.permute.xlu0 %280
        %v283 = vmul.f32 %v241, %v281
        %v284 = vmul.f32 %v242, %v281
        %285 = vst [vmem:[%s240] sm:$0xff] %v283
        %286 = vst [vmem:[%s240 + $0x8] sm:$0xff] %v284
        %s287 = sand.u32 %s140, 1
        %s288 = scalar_lea.sflag [#allocation4], %s287
        %s289 = sand.u32 %s140, 1
        %s290 = smul.addr %s289, 16
        %s291 = scalar_lea.vmem [#allocation5], %s290
        // Predicated region
        $region45: #{tpu_custom_call.1} parent=39 // pred_check
          %p292 = pneg %p150
        $region46: #{tpu_custom_call.1} parent=39 // pred_check_branch
          %294 = sbr.rel (%p292) target = $region48
        $region47: #{tpu_custom_call.1} parent=39 // pred_region
          %s296 = ssub.s32 256, 256
          %297 = vsyncadd %s288, %s296
          %s298 = smul.addr %s22, 2
          %s299 = smul.addr %s298, 128
          %s300 = scalar_lea.hbm %s5, %s299
          %s302 = sshll.u32 %s291, 4
          %s303 = int_to_ptr.vmem [resolvable:$true] %s302
          %305 = dma.vmem_to_hbm [thread:$0]  %s303, 256, %s300, %s288
        $region48: #{tpu_custom_call.1} parent=39 // pred_fallthru
          _
      $region40: #{tpu_custom_call.1} parent=5 // pred_fallthru
        _
      %p306 = scmp.le.s32.totalorder 2, %s17
      // Predicated region
      $region49: #{tpu_custom_call.1} parent=5 // pred_check
        %p307 = pneg %p306
      $region50: #{tpu_custom_call.1} parent=5 // pred_check_branch
        %309 = sbr.rel (%p307) target = $region52
      $region51: #{tpu_custom_call.1} parent=5 // pred_region
        %s310 = ssub.s32 %s17, 2
        // Predicated region
        $region53: #{tpu_custom_call.1} parent=51 // pred_check
          %p311 = pneg %p156
        $region54: #{tpu_custom_call.1} parent=51 // pred_check_branch
          %313 = sbr.rel (%p311) target = $region56
        $region55: #{tpu_custom_call.1} parent=51 // pred_region
          %s314 = sand.u32 %s141, 1
          %s315 = scalar_lea.sflag [#allocation4], %s314
          %s316 = sand.u32 %s141, 1
          %s317 = smul.addr %s316, 16
          %s318 = scalar_lea.vmem [#allocation5], %s317
          %319 = dma.done %s315, 256
        $region56: #{tpu_custom_call.1} parent=51 // pred_fallthru
          _
      $region52: #{tpu_custom_call.1} parent=5 // pred_fallthru
        _
    $region6: #{tpu_custom_call.1} parent=1 // loop_footer
      %s21 = sadd.s32 1, %s17
    $region7: #{tpu_custom_call.1} parent=1 // loop_footer_branch
      %16 = sbr.rel target = $region3
    $region8: #{tpu_custom_call.1} parent=1 // loop_exit
      _
    %320 = vsyncpa [#allocation3], 1
    %s321 = scalar_lea.sflag [#allocation3], 1
    %322 = vsyncpa %s321, 1
    %323 = vsyncpa [#allocation4], 1
    %s324 = scalar_lea.sflag [#allocation4], 1
    %325 = vsyncpa %s324, 1

</llo_original>
